<compile_context>
chip_gen: v5e
topology: v5e:2x2
jax: 0.10.0
libtpu: 0.0.40
codegen_flags: <defaults>
</compile_context>

<pallas_src>
import functools

import jax
import jax.numpy as jnp
from jax.experimental import pallas as pl
from jax.experimental.pallas import tpu as pltpu

PAD = 128        # lane-dense width for hidden / class dims
TM_MAX = 1024    # upper bound on the batch tile (VMEM use ~1.2 MiB double-buffered)


def _round_up(n, m):
    return ((n + m - 1) // m) * m


def _cdiv(a, b):
    return -(-a // b)


def _choose_tile(B):
    """Batch tile: 16-aligned (bf16 sublane pack), as large as possible, but with
    >=2 grid steps for large batches so the 'parallel' axis can use both v7x TCs."""
    B = max(B, 1)
    if B <= 256:
        return _round_up(B, 16)
    num_tiles = max(2, _cdiv(B, TM_MAX))
    return _round_up(_cdiv(B, num_tiles), 16)


def _mlp_kernel(x_ref, w_ref, b_ref, o_ref, *, input_dim):
    # x_ref: (TM, input_dim) f32/bf16 | w_ref: (3, PAD, PAD) bf16 | b_ref: (3, 1, PAD) f32
    x = x_ref[...]
    if x.dtype != jnp.bfloat16:          # accept bf16 x directly; cast only if needed
        x = x.astype(jnp.bfloat16)

    # fc1 + ReLU. Slice the ref (not the loaded value): only input_dim rows of the
    # padded w1 slab are loaded (input_dim should be a multiple of 16 for bf16 packing).
    w1 = w_ref[0, :input_dim, :]
    h = jnp.dot(x, w1, preferred_element_type=jnp.float32) + b_ref[0]
    h = jnp.maximum(h, 0.0)

    # fc2 + ReLU (f32 accumulate / bias / ReLU -> v5e-friendly; bf16 only at the dots)
    h = jnp.dot(h.astype(jnp.bfloat16), w_ref[1],
                preferred_element_type=jnp.float32) + b_ref[1]
    h = jnp.maximum(h, 0.0)

    # fc3 logits; padded class columns carry exact zeros (zero weights + zero bias).
    out = jnp.dot(h.astype(jnp.bfloat16), w_ref[2],
                  preferred_element_type=jnp.float32) + b_ref[2]
    o_ref[...] = out.astype(o_ref.dtype)


def prepare_params(params, compute_dtype=jnp.bfloat16):
    """One-time prep: PyTorch (out,in) weights -> (in,out), zero-pad to 128 lanes,
    pack weights into a (3, PAD, PAD) slab and biases into a (3, 1, PAD) slab."""
    w1, b1, w2, b2, w3, b3 = params
    input_dim = w1.shape[1]
    hidden_dim = w1.shape[0]
    num_classes = w3.shape[0]
    assert input_dim <= PAD and hidden_dim <= PAD and num_classes <= PAD

    def pad_wt(w):  # (out, in) -> padded (PAD, PAD) in (in, out) layout
        wt = jnp.asarray(w, jnp.float32).T
        return jnp.zeros((PAD, PAD), jnp.float32).at[: wt.shape[0], : wt.shape[1]].set(wt)

    def pad_b(b):
        return jnp.zeros((1, PAD), jnp.float32).at[0, : b.shape[0]].set(
            jnp.asarray(b, jnp.float32))

    w_slab = jnp.stack([pad_wt(w1), pad_wt(w2), pad_wt(w3)]).astype(compute_dtype)
    b_slab = jnp.stack([pad_b(b1), pad_b(b2), pad_b(b3)])  # (3, 1, PAD) f32
    return w_slab, b_slab, input_dim, hidden_dim, num_classes


def simple_asl_forward(x, prepped, *, slice_output=True, out_dtype=jnp.bfloat16):
    """Fused MLP forward. x: (B, input_dim) float32 or bfloat16.

    slice_output=True returns (B, num_classes) logits (convenient, but the slice
    is an extra XLA pass over the padded output at very large B).
    slice_output=False returns the padded (Bp, 128) slab for a fused consumer;
    padded class columns are exact zeros and rows >= B are padding.
    """
    w_slab, b_slab, input_dim, hidden_dim, num_classes = prepped
    B = x.shape[0]
    assert x.shape[1] == input_dim

    TM = _choose_tile(B)
    Bp = _round_up(B, TM)
    if Bp != B:
        x = jnp.pad(x, ((0, Bp - B), (0, 0)))

    # Useful FLOPs (unpadded dims); actual (padded) bytes moved.
    flops = 2 * Bp * (input_dim * hidden_dim + hidden_dim * hidden_dim
                      + hidden_dim * num_classes)
    out_itemsize = jnp.dtype(out_dtype).itemsize
    bytes_accessed = (Bp * input_dim * x.dtype.itemsize
                      + w_slab.size * w_slab.dtype.itemsize
                      + b_slab.size * b_slab.dtype.itemsize
                      + Bp * PAD * out_itemsize)

    out = pl.pallas_call(
        functools.partial(_mlp_kernel, input_dim=input_dim),
        out_shape=jax.ShapeDtypeStruct((Bp, PAD), out_dtype),
        grid=(Bp // TM,),
        in_specs=[
            pl.BlockSpec((TM, input_dim), lambda i: (i, 0)),
            pl.BlockSpec((3, PAD, PAD), lambda i: (0, 0, 0)),
            pl.BlockSpec((3, 1, PAD), lambda i: (0, 0, 0)),
        ],
        out_specs=pl.BlockSpec((TM, PAD), lambda i: (i, 0)),
        compiler_params=pltpu.CompilerParams(
            dimension_semantics=("parallel",)),
        cost_estimate=pl.CostEstimate(
            flops=flops, transcendentals=0, bytes_accessed=bytes_accessed),
    )(x, w_slab, b_slab)

    if slice_output:
        return out[:B, :num_classes]
    return out


def init_params(key, input_dim, hidden_dim, num_classes):
    """Deterministic synthetic params, PyTorch nn.Linear shapes: W (out, in), b (out,)."""
    ks = jax.random.split(key, 6)

    def lin(kw, kb, fan_in, fan_out):
        bound = 1.0 / jnp.sqrt(fan_in)
        w = jax.random.uniform(kw, (fan_out, fan_in), jnp.float32, -bound, bound)
        b = jax.random.uniform(kb, (fan_out,), jnp.float32, -bound, bound)
        return w, b

    w1, b1 = lin(ks[0], ks[1], input_dim, hidden_dim)
    w2, b2 = lin(ks[2], ks[3], hidden_dim, hidden_dim)
    w3, b3 = lin(ks[4], ks[5], hidden_dim, num_classes)
    return (w1, b1, w2, b2, w3, b3)


def reference_forward(x, params):
    w1, b1, w2, b2, w3, b3 = params
    h1 = jnp.maximum(x @ w1.T + b1, 0.0)
    h2 = jnp.maximum(h1 @ w2.T + b2, 0.0)
    return h2 @ w3.T + b3


if __name__ == "__main__":
    # Small shapes consistent with the module: landmark-vector MLP.
    batch = 8
    input_dim = 64     # e.g. flattened hand-landmark features (multiple of 16)
    hidden_dim = 32
    num_classes = 26   # A-Z ASL letters (synthetic label set)

    key = jax.random.PRNGKey(0)
    k_x, k_p = jax.random.split(key)
    x = jax.random.normal(k_x, (batch, input_dim), jnp.float32)
    params = init_params(k_p, input_dim, hidden_dim, num_classes)

    # One-time param prep (transpose / pad / pack / bf16 cast) — not per call.
    prepped = prepare_params(params)

    out = simple_asl_forward(x, prepped)
    out = jax.block_until_ready(out)

    ref = reference_forward(x, params)
    assert out.shape == (batch, num_classes)
    # bf16 matmul operands + bf16 output store, f32 accumulation -> loosened tolerance.
    assert jnp.allclose(out.astype(jnp.float32), ref, atol=3e-2, rtol=3e-2), \
        "mismatch vs JAX reference"

    print("KERNEL_OK")
</pallas_src>

<mosaic_0001>
module attributes {stable_mosaic.version = 11 : i64} {
  func.func @_mlp_kernel(%arg0: i32, %arg1: memref<16x64xf32, #tpu.memory_space<vmem>>, %arg2: memref<3x128x128xbf16, #tpu.memory_space<vmem>>, %arg3: memref<3x1x128xf32, #tpu.memory_space<vmem>>, %arg4: memref<16x128xbf16, #tpu.memory_space<vmem>>) attributes {dimension_semantics = [#tpu.dimension_semantics<parallel>], iteration_bounds = array<i64: 1>, scalar_prefetch = 0 : i64, scratch_operands = 0 : i64, tpu.core_type = #tpu.core_type<tc>, window_params = [{transform_indices = @transform_0, window_bounds = array<i64: 16, 64>}, {pipeline_mode = #tpu.pipeline_mode<synchronous>, transform_indices = @transform_1, window_bounds = array<i64: 3, 128, 128>}, {pipeline_mode = #tpu.pipeline_mode<synchronous>, transform_indices = @transform_2, window_bounds = array<i64: 3, 1, 128>}, {transform_indices = @transform_3, window_bounds = array<i64: 16, 128>}]} {
    %c0 = arith.constant 0 : index
    %c0_0 = arith.constant 0 : index
    %0 = vector.load %arg1[%c0, %c0_0] : memref<16x64xf32, #tpu.memory_space<vmem>>, vector<16x64xf32>
    %1 = arith.truncf %0 : vector<16x64xf32> to vector<16x64xbf16>
    %c0_1 = arith.constant 0 : index
    %c0_2 = arith.constant 0 : index
    %c0_3 = arith.constant 0 : index
    %2 = vector.load %arg2[%c0_1, %c0_2, %c0_3] : memref<3x128x128xbf16, #tpu.memory_space<vmem>>, vector<1x64x128xbf16>
    %3 = vector.shape_cast %2 : vector<1x64x128xbf16> to vector<64x128xbf16>
    %cst = arith.constant dense<0.000000e+00> : vector<16x128xf32>
    %4 = tpu.matmul %1, %3, %cst {dimension_numbers = #tpu.dot_dimension_numbers<[1], [0], [0], [1], [0, 0, 1, 1], [], []>} : vector<16x64xbf16>, vector<64x128xbf16>, vector<16x128xf32> -> vector<16x128xf32>
    %c0_4 = arith.constant 0 : index
    %c0_5 = arith.constant 0 : index
    %c0_6 = arith.constant 0 : index
    %5 = vector.load %arg3[%c0_4, %c0_5, %c0_6] : memref<3x1x128xf32, #tpu.memory_space<vmem>>, vector<1x1x128xf32>
    %6 = vector.shape_cast %5 : vector<1x1x128xf32> to vector<1x128xf32>
    %7 = vector.broadcast %6 : vector<1x128xf32> to vector<16x128xf32>
    %8 = arith.addf %4, %7 : vector<16x128xf32>
    %cst_7 = arith.constant 0.000000e+00 : f32
    %9 = vector.broadcast %cst_7 : f32 to vector<16x128xf32>
    %10 = arith.maximumf %8, %9 : vector<16x128xf32>
    %11 = arith.truncf %10 : vector<16x128xf32> to vector<16x128xbf16>
    %c1 = arith.constant 1 : index
    %c0_8 = arith.constant 0 : index
    %c0_9 = arith.constant 0 : index
    %12 = vector.load %arg2[%c1, %c0_8, %c0_9] : memref<3x128x128xbf16, #tpu.memory_space<vmem>>, vector<1x128x128xbf16>
    %13 = vector.shape_cast %12 : vector<1x128x128xbf16> to vector<128x128xbf16>
    %cst_10 = arith.constant dense<0.000000e+00> : vector<16x128xf32>
    %14 = tpu.matmul %11, %13, %cst_10 {dimension_numbers = #tpu.dot_dimension_numbers<[1], [0], [0], [1], [0, 0, 1, 1], [], []>} : vector<16x128xbf16>, vector<128x128xbf16>, vector<16x128xf32> -> vector<16x128xf32>
    %c1_11 = arith.constant 1 : index
    %c0_12 = arith.constant 0 : index
    %c0_13 = arith.constant 0 : index
    %15 = vector.load %arg3[%c1_11, %c0_12, %c0_13] : memref<3x1x128xf32, #tpu.memory_space<vmem>>, vector<1x1x128xf32>
    %16 = vector.shape_cast %15 : vector<1x1x128xf32> to vector<1x128xf32>
    %17 = vector.broadcast %16 : vector<1x128xf32> to vector<16x128xf32>
    %18 = arith.addf %14, %17 : vector<16x128xf32>
    %cst_14 = arith.constant 0.000000e+00 : f32
    %19 = vector.broadcast %cst_14 : f32 to vector<16x128xf32>
    %20 = arith.maximumf %18, %19 : vector<16x128xf32>
    %21 = arith.truncf %20 : vector<16x128xf32> to vector<16x128xbf16>
    %c2 = arith.constant 2 : index
    %c0_15 = arith.constant 0 : index
    %c0_16 = arith.constant 0 : index
    %22 = vector.load %arg2[%c2, %c0_15, %c0_16] : memref<3x128x128xbf16, #tpu.memory_space<vmem>>, vector<1x128x128xbf16>
    %23 = vector.shape_cast %22 : vector<1x128x128xbf16> to vector<128x128xbf16>
    %cst_17 = arith.constant dense<0.000000e+00> : vector<16x128xf32>
    %24 = tpu.matmul %21, %23, %cst_17 {dimension_numbers = #tpu.dot_dimension_numbers<[1], [0], [0], [1], [0, 0, 1, 1], [], []>} : vector<16x128xbf16>, vector<128x128xbf16>, vector<16x128xf32> -> vector<16x128xf32>
    %c2_18 = arith.constant 2 : index
    %c0_19 = arith.constant 0 : index
    %c0_20 = arith.constant 0 : index
    %25 = vector.load %arg3[%c2_18, %c0_19, %c0_20] : memref<3x1x128xf32, #tpu.memory_space<vmem>>, vector<1x1x128xf32>
    %26 = vector.shape_cast %25 : vector<1x1x128xf32> to vector<1x128xf32>
    %27 = vector.broadcast %26 : vector<1x128xf32> to vector<16x128xf32>
    %28 = arith.addf %24, %27 : vector<16x128xf32>
    %29 = arith.truncf %28 : vector<16x128xf32> to vector<16x128xbf16>
    %c0_21 = arith.constant 0 : index
    %c0_22 = arith.constant 0 : index
    %30 = vector.load %arg4[%c0_21, %c0_22] : memref<16x128xbf16, #tpu.memory_space<vmem>>, vector<16x128xbf16>
    tpu.vector_store %arg4[%c0_21, %c0_22], %29 {strides = array<i32>} : memref<16x128xbf16, #tpu.memory_space<vmem>>, vector<16x128xbf16>,
    return
  }
  func.func @transform_0(%arg0: i32) -> (i32, i32) {
    %c0_i32 = arith.constant 0 : i32
    %c0_i32_0 = arith.constant 0 : i32
    return %arg0, %c0_i32 : i32, i32
  }
  func.func @transform_1(%arg0: i32) -> (i32, i32, i32) {
    %c0_i32 = arith.constant 0 : i32
    %c0_i32_0 = arith.constant 0 : i32
    %c0_i32_1 = arith.constant 0 : i32
    %c0_i32_2 = arith.constant 0 : i32
    return %c0_i32, %c0_i32_0, %c0_i32_1 : i32, i32, i32
  }
  func.func @transform_2(%arg0: i32) -> (i32, i32, i32) {
    %c0_i32 = arith.constant 0 : i32
    %c0_i32_0 = arith.constant 0 : i32
    %c0_i32_1 = arith.constant 0 : i32
    %c0_i32_2 = arith.constant 0 : i32
    return %c0_i32, %c0_i32_0, %c0_i32_1 : i32, i32, i32
  }
  func.func @transform_3(%arg0: i32) -> (i32, i32) {
    %c0_i32 = arith.constant 0 : i32
    %c0_i32_0 = arith.constant 0 : i32
    return %arg0, %c0_i32 : i32, i32
  }
}

</mosaic_0001>

<llo_original>
// kernel: tpu_custom_call.1
$region0: #{tpu_custom_call.1}
  #allocation0 [shape = 'u32[]', space=smem, size = 0x4, offset = 0x4, fixed_abs, tag = 'smem constant byte address 0x4 - core index']
  #allocation1 [shape = 'u32[72,128]{1,0:T(1,128)}', space=vmem, size = 0x9000, scoped, tag = 'internal scratch']
  %s0 = inlined_call_operand.hbm [shape: f32[16,64], index: 0, kind: input, shape index: {}]
  %s1 = inlined_call_operand.hbm [shape: bf16[3,128,128], index: 1, kind: input, shape index: {}]
  %s2 = inlined_call_operand.hbm [shape: f32[3,1,128], index: 2, kind: input, shape index: {}]
  %s3 = inlined_call_operand.hbm [shape: bf16[16,128], index: 3, kind: output, shape index: {}]
  %s4 = sld [smem:[#allocation0]]
  $region34: #{tpu_custom_call.1} parent=0
    _
  %s6 = ssub.s32 1, %s4
  %s7 = scalar_select 0, %s6, %s4
  $region1: #{tpu_custom_call.1} parent=0
    #allocation2 [shape = 'u8[8192]{0}', space=vmem, size = 0x2000, scoped, tag = 'input window, operand 0, single buffered']
    #allocation3 [shape = 's32[1]{0}', space=sflag, size = 0x4, scoped, tag = 'scoped memory for tpu_custom_call.1']
    #allocation4 [shape = 's32[1]{0}', space=sflag, size = 0x4, scoped, tag = 'scoped memory for tpu_custom_call.1']
    #allocation5 [shape = 'u8[98304]{0}', space=vmem, size = 0x18000, scoped, tag = 'input window, operand 1, single buffered']
    #allocation6 [shape = 's32[1]{0}', space=sflag, size = 0x4, scoped, tag = 'scoped memory for tpu_custom_call.1']
    #allocation7 [shape = 'u8[1536]{0}', space=vmem, size = 0x800, scoped, tag = 'input window, operand 2, single buffered']
    #allocation8 [shape = 'u8[4096]{0}', space=vmem, size = 0x1000, scoped, tag = 'output window, operand 0, single buffered']
    %8 = vsyncpa [#allocation3], 0
    %9 = vsyncpa [#allocation6], 0
    %10 = vsyncpa [#allocation4], 0
    // Predicated region
    $region2: #{tpu_custom_call.1} parent=1 // pred_check
      _
    $region3: #{tpu_custom_call.1} parent=1 // pred_check_branch
      %12 = sbr.rel (0) target = $region5
    $region4: #{tpu_custom_call.1} parent=1 // pred_region
      %14 = vsyncadd [#allocation3], 0
      %s15 = sshll.u32 %s0, 4
      %s16 = int_to_ptr.hbm [resolvable:$true] %s15
      %s17 = sshll.u32 [#allocation2], 4
      %s18 = int_to_ptr.vmem [resolvable:$true] %s17
      %23 = dma.hbm_to_vmem [thread:$0]  %s16, 256, %s18, [#allocation3], 128, 128, 8
    $region5: #{tpu_custom_call.1} parent=1 // pred_fallthru
      _
    // Predicated region
    $region6: #{tpu_custom_call.1} parent=1 // pred_check
      _
    $region7: #{tpu_custom_call.1} parent=1 // pred_check_branch
      %25 = sbr.rel (0) target = $region9
    $region8: #{tpu_custom_call.1} parent=1 // pred_region
      %27 = vsyncadd [#allocation6], 0
      %s28 = sshll.u32 %s1, 4
      %s29 = int_to_ptr.hbm [resolvable:$true] %s28
      %s30 = sshll.u32 [#allocation5], 4
      %s31 = int_to_ptr.vmem [resolvable:$true] %s30
      %36 = dma.hbm_to_vmem [thread:$0]  %s29, 3072, %s31, [#allocation6], 64, 64, 4
    $region9: #{tpu_custom_call.1} parent=1 // pred_fallthru
      _
    // Predicated region
    $region10: #{tpu_custom_call.1} parent=1 // pred_check
      _
    $region11: #{tpu_custom_call.1} parent=1 // pred_check_branch
      %38 = sbr.rel (0) target = $region13
    $region12: #{tpu_custom_call.1} parent=1 // pred_region
      %40 = vsyncadd [#allocation6], 0
      %s41 = sshll.u32 %s2, 4
      %s42 = int_to_ptr.hbm [resolvable:$true] %s41
      %s43 = sshll.u32 [#allocation7], 4
      %s44 = int_to_ptr.vmem [resolvable:$true] %s43
      %49 = dma.hbm_to_vmem [thread:$0]  %s42, 48, %s44, [#allocation6], 16, 16, 1
    $region13: #{tpu_custom_call.1} parent=1 // pred_fallthru
      _
    // Predicated region
    $region14: #{tpu_custom_call.1} parent=1 // pred_check
      _
    $region15: #{tpu_custom_call.1} parent=1 // pred_check_branch
      %51 = sbr.rel (0) target = $region17
    $region16: #{tpu_custom_call.1} parent=1 // pred_region
      %53 = dma.done [#allocation3], 256
    $region17: #{tpu_custom_call.1} parent=1 // pred_fallthru
      _
    // Predicated region
    $region18: #{tpu_custom_call.1} parent=1 // pred_check
      _
    $region19: #{tpu_custom_call.1} parent=1 // pred_check_branch
      %55 = sbr.rel (0) target = $region21
    $region20: #{tpu_custom_call.1} parent=1 // pred_region
      %57 = dma.done [#allocation6], 3072
    $region21: #{tpu_custom_call.1} parent=1 // pred_fallthru
      _
    // Predicated region
    $region22: #{tpu_custom_call.1} parent=1 // pred_check
      _
    $region23: #{tpu_custom_call.1} parent=1 // pred_check_branch
      %59 = sbr.rel (0) target = $region25
    $region24: #{tpu_custom_call.1} parent=1 // pred_region
      %61 = dma.done [#allocation6], 48
    $region25: #{tpu_custom_call.1} parent=1 // pred_fallthru
      _
    %v63 = vld [vmem:[#allocation2] sm:$0xff]
    %v64 = vld [vmem:[#allocation2 + $0x8] sm:$0xff]
    %v65 = vpack.c.bf16 %v64, %v63
    %v66 = vld [vmem:[#allocation5] sm:$0xf]
    %v67 = vld [vmem:[#allocation5 + $0x4] sm:$0xf]
    %v68 = vld [vmem:[#allocation5 + $0x8] sm:$0xf]
    %v69 = vld [vmem:[#allocation5 + $0xc] sm:$0xf]
    %v70 = vld [vmem:[#allocation5 + $0x10] sm:$0xf]
    %v71 = vld [vmem:[#allocation5 + $0x14] sm:$0xf]
    %v72 = vld [vmem:[#allocation5 + $0x18] sm:$0xf]
    %v73 = vld [vmem:[#allocation5 + $0x1c] sm:$0xf]
    %v74 = vld [vmem:[#allocation7] sm:$0x1]
    %v76 = vperm.slane %v74, 0
    %v86 = vunpack.c.l.b16 %v66
    %v87 = vunpack.c.l.b16 %v67
    %v88 = vunpack.c.l.b16 %v68
    %v89 = vunpack.c.l.b16 %v69
    %v90 = vunpack.c.l.b16 %v70
    %v91 = vunpack.c.l.b16 %v71
    %v92 = vunpack.c.l.b16 %v72
    %v93 = vunpack.c.l.b16 %v73
    %v94 = vpack.c.b16 %v87, %v86
    %v95 = vpack.c.b16 %v89, %v88
    %v96 = vpack.c.b16 %v91, %v90
    %v97 = vpack.c.b16 %v93, %v92
    %vm102 = vcmask 523264
    %v104 = vsel %vm102, %v65, 0
    %106 = vmatpush.bf16.msra.mxu0 0
    %107 = vmatpush.bf16.msra.mxu0 0
    %108 = vmatpush.bf16.msra.mxu0 0
    %109 = vmatpush.bf16.msra.mxu0 0
    %110 = vmatpush.bf16.msra.mxu0 %v97
    %111 = vmatpush.bf16.msra.mxu0 %v96
    %112 = vmatpush.bf16.msra.mxu0 %v95
    %113 = vmatpush.bf16.msra.mxu0 %v94
    %114 = vmatmul.bf16.gmra.mxu0 %v104
    %v115 = vpop.f32.mrf.mxu0
    %v116 = vadd.f32 %v76, %v115
    %v117 = vpop.f32.mrf.mxu0
    %v118 = vadd.f32 %v76, %v117
    %119 = vdwg.mxu0
    %v120 = vmax.f32 %v116, 0.0
    %v121 = vmax.f32 %v118, 0.0
    %v122 = vpack.c.bf16 %v121, %v120
    %s123 = scalar_lea.vmem [#allocation5], 64
    %v124 = vld [vmem:[%s123] sm:$0xf]
    %v125 = vld [vmem:[%s123 + $0x4] sm:$0xf]
    %v126 = vld [vmem:[%s123 + $0x8] sm:$0xf]
    %v127 = vld [vmem:[%s123 + $0xc] sm:$0xf]
    %v128 = vld [vmem:[%s123 + $0x10] sm:$0xf]
    %v129 = vld [vmem:[%s123 + $0x14] sm:$0xf]
    %v130 = vld [vmem:[%s123 + $0x18] sm:$0xf]
    %v131 = vld [vmem:[%s123 + $0x1c] sm:$0xf]
    %v132 = vld [vmem:[%s123 + $0x20] sm:$0xf]
    %v133 = vld [vmem:[%s123 + $0x24] sm:$0xf]
    %v134 = vld [vmem:[%s123 + $0x28] sm:$0xf]
    %v135 = vld [vmem:[%s123 + $0x2c] sm:$0xf]
    %v136 = vld [vmem:[%s123 + $0x30] sm:$0xf]
    %v137 = vld [vmem:[%s123 + $0x34] sm:$0xf]
    %v138 = vld [vmem:[%s123 + $0x38] sm:$0xf]
    %v139 = vld [vmem:[%s123 + $0x3c] sm:$0xf]
    %s140 = scalar_lea.vmem [#allocation7], 1
    %v141 = vld [vmem:[%s140] sm:$0x1]
    %v143 = vperm.slane %v141, 0
    %v161 = vunpack.c.l.b16 %v124
    %v162 = vunpack.c.l.b16 %v125
    %v163 = vunpack.c.l.b16 %v126
    %v164 = vunpack.c.l.b16 %v127
    %v165 = vunpack.c.l.b16 %v128
    %v166 = vunpack.c.l.b16 %v129
    %v167 = vunpack.c.l.b16 %v130
    %v168 = vunpack.c.l.b16 %v131
    %v169 = vunpack.c.l.b16 %v132
    %v170 = vunpack.c.l.b16 %v133
    %v171 = vunpack.c.l.b16 %v134
    %v172 = vunpack.c.l.b16 %v135
    %v173 = vunpack.c.l.b16 %v136
    %v174 = vunpack.c.l.b16 %v137
    %v175 = vunpack.c.l.b16 %v138
    %v176 = vunpack.c.l.b16 %v139
    %v177 = vpack.c.b16 %v162, %v161
    %v178 = vpack.c.b16 %v164, %v163
    %v179 = vpack.c.b16 %v166, %v165
    %v180 = vpack.c.b16 %v168, %v167
    %v181 = vpack.c.b16 %v170, %v169
    %v182 = vpack.c.b16 %v172, %v171
    %v183 = vpack.c.b16 %v174, %v173
    %v184 = vpack.c.b16 %v176, %v175
    %193 = vmatpush.bf16.msra.mxu0 %v184
    %194 = vmatpush.bf16.msra.mxu0 %v183
    %195 = vmatpush.bf16.msra.mxu0 %v182
    %196 = vmatpush.bf16.msra.mxu0 %v181
    %197 = vmatpush.bf16.msra.mxu0 %v180
    %198 = vmatpush.bf16.msra.mxu0 %v179
    %199 = vmatpush.bf16.msra.mxu0 %v178
    %200 = vmatpush.bf16.msra.mxu0 %v177
    %201 = vmatmul.bf16.gmra.mxu0 %v122
    %v202 = vpop.f32.mrf.mxu0
    %v203 = vadd.f32 %v143, %v202
    %v204 = vpop.f32.mrf.mxu0
    %v205 = vadd.f32 %v143, %v204
    %206 = vdwg.mxu0
    %v207 = vmax.f32 %v203, 0.0
    %v208 = vmax.f32 %v205, 0.0
    %v209 = vpack.c.bf16 %v208, %v207
    %s210 = scalar_lea.vmem [#allocation5], 128
    %v211 = vld [vmem:[%s210] sm:$0xf]
    %v212 = vld [vmem:[%s210 + $0x4] sm:$0xf]
    %v213 = vld [vmem:[%s210 + $0x8] sm:$0xf]
    %v214 = vld [vmem:[%s210 + $0xc] sm:$0xf]
    %v215 = vld [vmem:[%s210 + $0x10] sm:$0xf]
    %v216 = vld [vmem:[%s210 + $0x14] sm:$0xf]
    %v217 = vld [vmem:[%s210 + $0x18] sm:$0xf]
    %v218 = vld [vmem:[%s210 + $0x1c] sm:$0xf]
    %v219 = vld [vmem:[%s210 + $0x20] sm:$0xf]
    %v220 = vld [vmem:[%s210 + $0x24] sm:$0xf]
    %v221 = vld [vmem:[%s210 + $0x28] sm:$0xf]
    %v222 = vld [vmem:[%s210 + $0x2c] sm:$0xf]
    %v223 = vld [vmem:[%s210 + $0x30] sm:$0xf]
    %v224 = vld [vmem:[%s210 + $0x34] sm:$0xf]
    %v225 = vld [vmem:[%s210 + $0x38] sm:$0xf]
    %v226 = vld [vmem:[%s210 + $0x3c] sm:$0xf]
    %s227 = scalar_lea.vmem [#allocation7], 2
    %v228 = vld [vmem:[%s227] sm:$0x1]
    %v230 = vperm.slane %v228, 0
    %v248 = vunpack.c.l.b16 %v211
    %v249 = vunpack.c.l.b16 %v212
    %v250 = vunpack.c.l.b16 %v213
    %v251 = vunpack.c.l.b16 %v214
    %v252 = vunpack.c.l.b16 %v215
    %v253 = vunpack.c.l.b16 %v216
    %v254 = vunpack.c.l.b16 %v217
    %v255 = vunpack.c.l.b16 %v218
    %v256 = vunpack.c.l.b16 %v219
    %v257 = vunpack.c.l.b16 %v220
    %v258 = vunpack.c.l.b16 %v221
    %v259 = vunpack.c.l.b16 %v222
    %v260 = vunpack.c.l.b16 %v223
    %v261 = vunpack.c.l.b16 %v224
    %v262 = vunpack.c.l.b16 %v225
    %v263 = vunpack.c.l.b16 %v226
    %v264 = vpack.c.b16 %v249, %v248
    %v265 = vpack.c.b16 %v251, %v250
    %v266 = vpack.c.b16 %v253, %v252
    %v267 = vpack.c.b16 %v255, %v254
    %v268 = vpack.c.b16 %v257, %v256
    %v269 = vpack.c.b16 %v259, %v258
    %v270 = vpack.c.b16 %v261, %v260
    %v271 = vpack.c.b16 %v263, %v262
    %280 = vmatpush.bf16.msra.mxu0 %v271
    %281 = vmatpush.bf16.msra.mxu0 %v270
    %282 = vmatpush.bf16.msra.mxu0 %v269
    %283 = vmatpush.bf16.msra.mxu0 %v268
    %284 = vmatpush.bf16.msra.mxu0 %v267
    %285 = vmatpush.bf16.msra.mxu0 %v266
    %286 = vmatpush.bf16.msra.mxu0 %v265
    %287 = vmatpush.bf16.msra.mxu0 %v264
    %288 = vmatmul.bf16.gmra.mxu0 %v209
    %v289 = vpop.f32.mrf.mxu0
    %v290 = vadd.f32 %v230, %v289
    %v291 = vpop.f32.mrf.mxu0
    %v292 = vadd.f32 %v230, %v291
    %293 = vdwg.mxu0
    %v294 = vpack.c.bf16 %v290, %v290
    %v295 = vpack.c.bf16 %v292, %v292
    %296 = vst [vmem:[#allocation8] sm:$0xf] %v294
    %297 = vst [vmem:[#allocation8 + $0x4] sm:$0xf] %v295
    // Predicated region
    $region26: #{tpu_custom_call.1} parent=1 // pred_check
      _
    $region27: #{tpu_custom_call.1} parent=1 // pred_check_branch
      %299 = sbr.rel (0) target = $region29
    $region28: #{tpu_custom_call.1} parent=1 // pred_region
      %301 = vsyncadd [#allocation4], 0
      %s302 = sshll.u32 [#allocation8], 4
      %s303 = int_to_ptr.vmem [resolvable:$true] %s302
      %s304 = sshll.u32 %s3, 4
      %s305 = int_to_ptr.hbm [resolvable:$true] %s304
      %310 = dma.vmem_to_hbm [thread:$0]  %s303, 128, %s305, [#allocation4], 64, 64, 4
    $region29: #{tpu_custom_call.1} parent=1 // pred_fallthru
      _
    // Predicated region
    $region30: #{tpu_custom_call.1} parent=1 // pred_check
      _
    $region31: #{tpu_custom_call.1} parent=1 // pred_check_branch
      %312 = sbr.rel (0) target = $region33
    $region32: #{tpu_custom_call.1} parent=1 // pred_region
      %314 = dma.done [#allocation4], 128
    $region33: #{tpu_custom_call.1} parent=1 // pred_fallthru
      _
    %315 = vsyncpa [#allocation3], 1
    %316 = vsyncpa [#allocation6], 1
    %317 = vsyncpa [#allocation4], 1

</llo_original>
